<compile_context>
chip_gen: v5e
topology: v5e:2x2
jax: 0.10.0
libtpu: 0.0.40
codegen_flags: <defaults>
</compile_context>

<pallas_src>
import functools

import jax
import jax.numpy as jnp
from jax.experimental import pallas as pl
from jax.experimental.pallas import tpu as pltpu


def _vp_kernel(u_ref, noise_ref, coef_ref, std_ref, ut_ref, mean_ref):
    """Hot path: mean = coef * u ; u_t = mean + noise * std (all elementwise)."""
    coef = coef_ref[...]                       # (TB, 1) -> broadcasts along lanes
    std = std_ref[...]                         # (TB, 1)
    mean = coef * u_ref[...]                   # (TB, D)
    ut_ref[...] = (mean + noise_ref[...] * std).astype(ut_ref.dtype)
    mean_ref[...] = mean.astype(mean_ref.dtype)


def _pick_batch_tile(B, D, itemsize, vmem_budget_bytes=16 << 20):
    """Largest batch tile whose double-buffered working set fits a conservative
    VMEM budget (portable across v5e/v6e 128 MiB and v7x 64 MiB)."""
    # Per grid step, double-buffered: 2 buffers x 4 big (TB, D) arrays (+ tiny (TB,1)s).
    denom = max(1, 2 * 4 * D * itemsize)
    max_rows = max(8, vmem_budget_bytes // denom)
    if B <= 8:
        return B                               # full-extent block satisfies the (8,128) rule
    tb = min(B, max_rows)
    return max(8, (tb // 8) * 8)               # keep 8-sublane granularity


def vp_sample_from_transition_kernel(u, t, noise, *, b0, b1, which_beta, tb=None):
    """Pallas implementation of VP.forward / sample_from_transition_kernel (s=None)."""
    B, D = u.shape
    dtype = u.dtype
    b0 = jnp.asarray(b0, dtype)
    b1 = jnp.asarray(b1, dtype)
    t = t.astype(dtype)

    # --- per-row scalar schedule (O(B) work, fused by XLA in the wrapper) ---
    if which_beta == 1:
        bt = b0 * t + (b1 - b0) * (t * t * 0.5)        # int_beta_fn1
    else:
        bt = -jnp.log1p(-t)                            # == -2*log(sqrt(1-t)), safer near t->1
    coef = jnp.exp(-0.5 * bt)                          # transition_mean_coefficient
    var = 1.0 - coef * coef                            # 1 - exp(-bt), single exp total
    std = jnp.sqrt(var)                                # transition_std

    coef2d = coef.reshape(B, 1)
    std2d = std.reshape(B, 1)

    # --- tiled, double-buffered elementwise kernel over the batch axis ---
    if tb is None:
        tb = _pick_batch_tile(B, D, jnp.dtype(dtype).itemsize)
    grid = (pl.cdiv(B, tb),)

    big_spec = pl.BlockSpec((tb, D), lambda i: (i, 0))     # lane-dense (last dim = D)
    col_spec = pl.BlockSpec((tb, 1), lambda i: (i, 0))     # per-row scalars

    # TODO(synk): for D < 128 a further win is folding k batch rows so k*D is a multiple
    # of 128 (lane-dense vregs); skipped here to keep coef/std broadcasting trivial.
    u_t, mean = pl.pallas_call(
        _vp_kernel,
        out_shape=(
            jax.ShapeDtypeStruct((B, D), dtype),  # u_t
            jax.ShapeDtypeStruct((B, D), dtype),  # mean
        ),
        grid=grid,
        in_specs=[big_spec, big_spec, col_spec, col_spec],
        out_specs=(big_spec, big_spec),
        compiler_params=pltpu.CompilerParams(
            dimension_semantics=("parallel",)),
    )(u, noise, coef2d, std2d)

    return {
        'u': u,
        'u_t': u_t,
        'noise': noise,
        'mean_coef': coef,
        'std': std,
        'var': var,
        'mean': mean,
        't': t,
        's': None,
    }


if __name__ == "__main__":
    # Module config (VP(d, max_beta, which_beta, device)); deterministic, in-script.
    d = 32
    max_beta = 20.0
    b0 = 0.1

    bsz = 8
    key = jax.random.PRNGKey(0)
    k_u, k_t, k_n = jax.random.split(key, 3)

    u = jax.random.normal(k_u, (bsz, d), dtype=jnp.float32)
    t = jax.random.uniform(k_t, (bsz,), dtype=jnp.float32, minval=0.01, maxval=0.99)
    noise = jax.random.normal(k_n, (bsz, d), dtype=jnp.float32)  # randn_like(u)

    # ---- which_beta == 1 (linear beta schedule) ----
    out = vp_sample_from_transition_kernel(
        u, t, noise, b0=b0, b1=max_beta, which_beta=1)
    jax.block_until_ready(out['u_t'])

    bt = b0 * t + (max_beta - b0) * (t ** 2 / 2.0)
    coef_ref = jnp.exp(-0.5 * bt)
    var_ref = 1.0 - jnp.exp(-bt)
    std_ref = jnp.sqrt(var_ref)
    u_t_ref = coef_ref[:, None] * u + noise * std_ref[:, None]

    assert jnp.allclose(out['u_t'], u_t_ref, atol=1e-5, rtol=1e-5)
    assert jnp.allclose(out['mean'], coef_ref[:, None] * u, atol=1e-5, rtol=1e-5)
    assert jnp.allclose(out['mean_coef'], coef_ref, atol=1e-5, rtol=1e-5)
    assert jnp.allclose(out['std'], std_ref, atol=1e-5, rtol=1e-5)
    assert jnp.allclose(out['var'], var_ref, atol=1e-5, rtol=1e-5)

    # ---- which_beta == 2 (1/(1-t) schedule) ----
    out2 = vp_sample_from_transition_kernel(
        u, t, noise, b0=b0, b1=max_beta, which_beta=2)
    jax.block_until_ready(out2['u_t'])

    bt2 = -2.0 * jnp.log(jnp.sqrt(1.0 - t))
    coef2 = jnp.exp(-0.5 * bt2)
    var2 = 1.0 - jnp.exp(-bt2)
    std2 = jnp.sqrt(var2)
    u_t_ref2 = coef2[:, None] * u + noise * std2[:, None]
    assert jnp.allclose(out2['u_t'], u_t_ref2, atol=1e-5, rtol=1e-5)

    # ---- multi-tile path (forces grid > 1 to exercise the batch tiling) ----
    B2, D2, TB2 = 32, 256, 8
    ku2, kt2, kn2 = jax.random.split(jax.random.PRNGKey(1), 3)
    u2 = jax.random.normal(ku2, (B2, D2), dtype=jnp.float32)
    t2 = jax.random.uniform(kt2, (B2,), dtype=jnp.float32, minval=0.01, maxval=0.99)
    n2 = jax.random.normal(kn2, (B2, D2), dtype=jnp.float32)
    out3 = vp_sample_from_transition_kernel(
        u2, t2, n2, b0=b0, b1=max_beta, which_beta=1, tb=TB2)
    jax.block_until_ready(out3['u_t'])

    bt3 = b0 * t2 + (max_beta - b0) * (t2 ** 2 / 2.0)
    coef3 = jnp.exp(-0.5 * bt3)
    std3 = jnp.sqrt(1.0 - jnp.exp(-bt3))
    u_t_ref3 = coef3[:, None] * u2 + n2 * std3[:, None]
    assert jnp.allclose(out3['u_t'], u_t_ref3, atol=1e-5, rtol=1e-5)
    assert jnp.allclose(out3['mean'], coef3[:, None] * u2, atol=1e-5, rtol=1e-5)

    print("KERNEL_OK")
</pallas_src>

<mosaic_0001>
module attributes {stable_mosaic.version = 11 : i64} {
  func.func @_vp_kernel(%arg0: i32, %arg1: memref<8x32xf32, #tpu.memory_space<vmem>>, %arg2: memref<8x32xf32, #tpu.memory_space<vmem>>, %arg3: memref<8x1xf32, #tpu.memory_space<vmem>>, %arg4: memref<8x1xf32, #tpu.memory_space<vmem>>, %arg5: memref<8x32xf32, #tpu.memory_space<vmem>>, %arg6: memref<8x32xf32, #tpu.memory_space<vmem>>) attributes {dimension_semantics = [#tpu.dimension_semantics<parallel>], iteration_bounds = array<i64: 1>, scalar_prefetch = 0 : i64, scratch_operands = 0 : i64, tpu.core_type = #tpu.core_type<tc>, window_params = [{transform_indices = @transform_0, window_bounds = array<i64: 8, 32>}, {transform_indices = @transform_1, window_bounds = array<i64: 8, 32>}, {transform_indices = @transform_2, window_bounds = array<i64: 8, 1>}, {transform_indices = @transform_3, window_bounds = array<i64: 8, 1>}, {transform_indices = @transform_4, window_bounds = array<i64: 8, 32>}, {transform_indices = @transform_5, window_bounds = array<i64: 8, 32>}]} {
    %c0 = arith.constant 0 : index
    %c0_0 = arith.constant 0 : index
    %0 = vector.load %arg3[%c0, %c0_0] : memref<8x1xf32, #tpu.memory_space<vmem>>, vector<8x1xf32>
    %c0_1 = arith.constant 0 : index
    %c0_2 = arith.constant 0 : index
    %1 = vector.load %arg4[%c0_1, %c0_2] : memref<8x1xf32, #tpu.memory_space<vmem>>, vector<8x1xf32>
    %c0_3 = arith.constant 0 : index
    %c0_4 = arith.constant 0 : index
    %2 = vector.load %arg1[%c0_3, %c0_4] : memref<8x32xf32, #tpu.memory_space<vmem>>, vector<8x32xf32>
    %3 = vector.broadcast %0 : vector<8x1xf32> to vector<8x32xf32>
    %4 = arith.mulf %3, %2 : vector<8x32xf32>
    %c0_5 = arith.constant 0 : index
    %c0_6 = arith.constant 0 : index
    %5 = vector.load %arg2[%c0_5, %c0_6] : memref<8x32xf32, #tpu.memory_space<vmem>>, vector<8x32xf32>
    %6 = vector.broadcast %1 : vector<8x1xf32> to vector<8x32xf32>
    %7 = arith.mulf %5, %6 : vector<8x32xf32>
    %8 = arith.addf %4, %7 : vector<8x32xf32>
    %c0_7 = arith.constant 0 : index
    %c0_8 = arith.constant 0 : index
    %9 = vector.load %arg5[%c0_7, %c0_8] : memref<8x32xf32, #tpu.memory_space<vmem>>, vector<8x32xf32>
    tpu.vector_store %arg5[%c0_7, %c0_8], %8 {strides = array<i32>} : memref<8x32xf32, #tpu.memory_space<vmem>>, vector<8x32xf32>,
    %c0_9 = arith.constant 0 : index
    %c0_10 = arith.constant 0 : index
    %10 = vector.load %arg6[%c0_9, %c0_10] : memref<8x32xf32, #tpu.memory_space<vmem>>, vector<8x32xf32>
    tpu.vector_store %arg6[%c0_9, %c0_10], %4 {strides = array<i32>} : memref<8x32xf32, #tpu.memory_space<vmem>>, vector<8x32xf32>,
    return
  }
  func.func @transform_0(%arg0: i32) -> (i32, i32) {
    %c0_i32 = arith.constant 0 : i32
    %c0_i32_0 = arith.constant 0 : i32
    return %arg0, %c0_i32 : i32, i32
  }
  func.func @transform_1(%arg0: i32) -> (i32, i32) {
    %c0_i32 = arith.constant 0 : i32
    %c0_i32_0 = arith.constant 0 : i32
    return %arg0, %c0_i32 : i32, i32
  }
  func.func @transform_2(%arg0: i32) -> (i32, i32) {
    %c0_i32 = arith.constant 0 : i32
    %c0_i32_0 = arith.constant 0 : i32
    return %arg0, %c0_i32 : i32, i32
  }
  func.func @transform_3(%arg0: i32) -> (i32, i32) {
    %c0_i32 = arith.constant 0 : i32
    %c0_i32_0 = arith.constant 0 : i32
    return %arg0, %c0_i32 : i32, i32
  }
  func.func @transform_4(%arg0: i32) -> (i32, i32) {
    %c0_i32 = arith.constant 0 : i32
    %c0_i32_0 = arith.constant 0 : i32
    return %arg0, %c0_i32 : i32, i32
  }
  func.func @transform_5(%arg0: i32) -> (i32, i32) {
    %c0_i32 = arith.constant 0 : i32
    %c0_i32_0 = arith.constant 0 : i32
    return %arg0, %c0_i32 : i32, i32
  }
}

</mosaic_0001>

<llo_original>
// kernel: tpu_custom_call.1
$region0: #{tpu_custom_call.1}
  #allocation0 [shape = 'u32[]', space=smem, size = 0x4, offset = 0x4, fixed_abs, tag = 'smem constant byte address 0x4 - core index']
  #allocation1 [shape = 'u32[72,128]{1,0:T(1,128)}', space=vmem, size = 0x9000, scoped, tag = 'internal scratch']
  %s0 = inlined_call_operand.vmem [shape: f32[8,32], index: 0, kind: input, shape index: {}]
  %s1 = inlined_call_operand.vmem [shape: f32[8,32], index: 1, kind: input, shape index: {}]
  %s2 = inlined_call_operand.vmem [shape: f32[8,1], index: 2, kind: input, shape index: {}]
  %s3 = inlined_call_operand.vmem [shape: f32[8,1], index: 3, kind: input, shape index: {}]
  %s4 = inlined_call_operand.hbm [shape: f32[8,32], index: 4, kind: output, shape index: {0}]
  %s5 = inlined_call_operand.hbm [shape: f32[8,32], index: 5, kind: output, shape index: {1}]
  %6 = xla_tuple %s4, %s5
  %s7 = sld [smem:[#allocation0]]
  $region34: #{tpu_custom_call.1} parent=0
    _
  %s9 = ssub.s32 1, %s7
  %s10 = scalar_select 0, %s9, %s7
  $region1: #{tpu_custom_call.1} parent=0
    #allocation2 [shape = 'u8[4096]{0}', space=vmem, size = 0x1000, scoped, tag = 'output window, operand 0, single buffered']
    #allocation3 [shape = 's32[1]{0}', space=sflag, size = 0x4, scoped, tag = 'scoped memory for tpu_custom_call.1']
    #allocation4 [shape = 'u8[4096]{0}', space=vmem, size = 0x1000, scoped, tag = 'output window, operand 1, single buffered']
    #allocation5 [shape = 's32[1]{0}', space=sflag, size = 0x4, scoped, tag = 'scoped memory for tpu_custom_call.1']
    %11 = vsyncpa [#allocation3], 0
    %12 = vsyncpa [#allocation5], 0
    // Predicated region
    $region2: #{tpu_custom_call.1} parent=1 // pred_check
      _
    $region3: #{tpu_custom_call.1} parent=1 // pred_check_branch
      %14 = sbr.rel (0) target = $region5
    $region4: #{tpu_custom_call.1} parent=1 // pred_region
      _
    $region5: #{tpu_custom_call.1} parent=1 // pred_fallthru
      _
    // Predicated region
    $region6: #{tpu_custom_call.1} parent=1 // pred_check
      _
    $region7: #{tpu_custom_call.1} parent=1 // pred_check_branch
      %16 = sbr.rel (0) target = $region9
    $region8: #{tpu_custom_call.1} parent=1 // pred_region
      _
    $region9: #{tpu_custom_call.1} parent=1 // pred_fallthru
      _
    // Predicated region
    $region10: #{tpu_custom_call.1} parent=1 // pred_check
      _
    $region11: #{tpu_custom_call.1} parent=1 // pred_check_branch
      %18 = sbr.rel (0) target = $region13
    $region12: #{tpu_custom_call.1} parent=1 // pred_region
      _
    $region13: #{tpu_custom_call.1} parent=1 // pred_fallthru
      _
    // Predicated region
    $region14: #{tpu_custom_call.1} parent=1 // pred_check
      _
    $region15: #{tpu_custom_call.1} parent=1 // pred_check_branch
      %20 = sbr.rel (0) target = $region17
    $region16: #{tpu_custom_call.1} parent=1 // pred_region
      _
    $region17: #{tpu_custom_call.1} parent=1 // pred_fallthru
      _
    %v21 = vld [vmem:[%s2] sm:$0xff]
    %v22 = vld [vmem:[%s3] sm:$0xff]
    %v23 = vld [vmem:[%s0] sm:$0xff]
    %25 = vset.pattern.permute.xlu0 0
    %26 = vperm.xlu0 %25, %v21
    %v27 = vpop.permute.xlu0 %26
    %v29 = vmul.f32 %v27, %v23
    %v30 = vld [vmem:[%s1] sm:$0xff]
    %32 = vset.pattern.permute.xlu0 0
    %33 = vperm.xlu0 %32, %v22
    %v34 = vpop.permute.xlu0 %33
    %v36 = vmul.f32 %v30, %v34
    %v37 = vadd.f32 %v29, %v36
    %vm38 = vcmask 261120
    %39 = vst.msk [vmem:[#allocation2] sm:$0xff] %vm38, %v37
    %40 = vst.msk [vmem:[#allocation4] sm:$0xff] %vm38, %v29
    // Predicated region
    $region18: #{tpu_custom_call.1} parent=1 // pred_check
      _
    $region19: #{tpu_custom_call.1} parent=1 // pred_check_branch
      %42 = sbr.rel (0) target = $region21
    $region20: #{tpu_custom_call.1} parent=1 // pred_region
      %44 = vsyncadd [#allocation3], 0
      %s46 = sshll.u32 [#allocation2], 4
      %s47 = int_to_ptr.vmem [resolvable:$true] %s46
      %s48 = sshll.u32 %s4, 4
      %s49 = int_to_ptr.hbm [resolvable:$true] %s48
      %51 = dma.vmem_to_hbm [thread:$0]  %s47, 128, %s49, [#allocation3]
    $region21: #{tpu_custom_call.1} parent=1 // pred_fallthru
      _
    // Predicated region
    $region22: #{tpu_custom_call.1} parent=1 // pred_check
      _
    $region23: #{tpu_custom_call.1} parent=1 // pred_check_branch
      %53 = sbr.rel (0) target = $region25
    $region24: #{tpu_custom_call.1} parent=1 // pred_region
      %55 = vsyncadd [#allocation5], 0
      %s57 = sshll.u32 [#allocation4], 4
      %s58 = int_to_ptr.vmem [resolvable:$true] %s57
      %s59 = sshll.u32 %s5, 4
      %s60 = int_to_ptr.hbm [resolvable:$true] %s59
      %62 = dma.vmem_to_hbm [thread:$0]  %s58, 128, %s60, [#allocation5]
    $region25: #{tpu_custom_call.1} parent=1 // pred_fallthru
      _
    // Predicated region
    $region26: #{tpu_custom_call.1} parent=1 // pred_check
      _
    $region27: #{tpu_custom_call.1} parent=1 // pred_check_branch
      %64 = sbr.rel (0) target = $region29
    $region28: #{tpu_custom_call.1} parent=1 // pred_region
      %66 = dma.done [#allocation3], 128
    $region29: #{tpu_custom_call.1} parent=1 // pred_fallthru
      _
    // Predicated region
    $region30: #{tpu_custom_call.1} parent=1 // pred_check
      _
    $region31: #{tpu_custom_call.1} parent=1 // pred_check_branch
      %68 = sbr.rel (0) target = $region33
    $region32: #{tpu_custom_call.1} parent=1 // pred_region
      %70 = dma.done [#allocation5], 128
    $region33: #{tpu_custom_call.1} parent=1 // pred_fallthru
      _
    %71 = vsyncpa [#allocation3], 1
    %72 = vsyncpa [#allocation5], 1

</llo_original>
